<compile_context>
chip_gen: v7x
topology: tpu7x:2x2x1
jax: 0.10.0
libtpu: 0.0.40
codegen_flags: <defaults>
</compile_context>

<pallas_src>
import functools

import jax
import jax.numpy as jnp
from jax import lax
from jax.experimental import pallas as pl
from jax.experimental.pallas import tpu as pltpu


# ---------------------------------------------------------------------------
# Per-generation tile / VMEM budgets.
# ---------------------------------------------------------------------------
def _budgets():
    try:
        kind = jax.devices()[0].device_kind.lower()
    except Exception:  # defensive: fall back to conservative settings
        kind = ""
    if ("v5" in kind or "v6" in kind) and "v7" not in kind:
        # v5e / v6e: 128 MiB physical VMEM -> bigger pass-1 blocks, higher cap.
        return dict(p1_block=8 << 20, p2_block=4 << 20,
                    vmem=64 << 20, vmem_cap=100 << 20,
                    fused_x=12 << 20, fused_vmem=80 << 20)
    # v7x (64 MiB VMEM per TensorCore) and unknown targets: conservative.
    return dict(p1_block=4 << 20, p2_block=4 << 20,
                vmem=32 << 20, vmem_cap=48 << 20,
                fused_x=6 << 20, fused_vmem=44 << 20)


def _vmem_limit(cfg, needed):
    return int(min(cfg["vmem_cap"], max(cfg["vmem"], needed)))


def _choose_block(N, C, HW, itemsize, budget):
    """Pick (nb, ts): batch items and spatial elements per block.

    ts is a multiple of 128 dividing HW when possible (lane-dense vld/vst);
    for ragged HW the full spatial extent stays on the lane axis and the block
    is grown by folding nb batch items instead, so each grid step still moves
    ~`budget` bytes.
    """
    if HW % 128 == 0:
        max_ts = max(128, budget // max(1, C * itemsize))
        ts = HW
        t = min(HW, (max_ts // 128) * 128)
        while t >= 128:
            if HW % t == 0:
                ts = t
                break
            t -= 128
    else:
        # TODO(synk): for HW < 128 with C >= 128 a lane-swapped layout
        # (C on the lane axis) would be denser; needs an HBM transpose.
        ts = HW
    row_bytes = C * ts * itemsize
    cap = max(1, budget // max(1, row_bytes))
    nb = 1
    d = min(N, cap)
    while d >= 1:
        if N % d == 0:
            nb = d
            break
        d -= 1
    return nb, ts


# ---------------------------------------------------------------------------
# Kernels.
# ---------------------------------------------------------------------------
def _stats_kernel(x_ref, psum_ref, psq_ref, acc_s, acc_q):
    """Per-(batch-block, channel) sum and sum-of-squares.

    x_ref:            (nb, C, ts) tile of x.
    psum_ref/psq_ref: (C, 1) per-batch-block outputs (written at last step).
    acc_s/acc_q:      (C, ts) f32 lane-partial accumulators (VMEM scratch).
    """
    s = pl.program_id(1)

    @pl.when(s == 0)
    def _init():
        acc_s[...] = jnp.zeros_like(acc_s)
        acc_q[...] = jnp.zeros_like(acc_q)

    x = x_ref[...].astype(jnp.float32)              # (nb, C, ts)
    acc_s[...] += jnp.sum(x, axis=0)                 # pure VPU adds
    acc_q[...] += jnp.sum(x * x, axis=0)

    @pl.when(s == pl.num_programs(1) - 1)
    def _finalize():
        # Single cross-lane (XLU) reduce per batch block, not per step.
        psum_ref[...] = jnp.sum(acc_s[...], axis=1, keepdims=True)
        psq_ref[...] = jnp.sum(acc_q[...], axis=1, keepdims=True)


def _affine_kernel(x_ref, scale_ref, shift_ref, y_ref):
    """y = x * scale + shift; scale/shift are (C, 1) per-channel vectors."""
    x = x_ref[...].astype(jnp.float32)               # (nb, C, ts)
    y_ref[...] = (x * scale_ref[...] + shift_ref[...]).astype(y_ref.dtype)


def _fused_train_kernel(x_ref, g_ref, b_ref, y_ref, mean_ref, var_ref, *, eps):
    """VMEM-resident fast path: stats + normalize in one pass (1R + 1W HBM)."""
    x = x_ref[...].astype(jnp.float32)               # (N, C, HW)
    inv_m = 1.0 / (x.shape[0] * x.shape[2])
    mean = jnp.sum(jnp.sum(x, axis=0), axis=1, keepdims=True) * inv_m      # (C,1)
    d = x - mean
    var = jnp.sum(jnp.sum(d * d, axis=0), axis=1, keepdims=True) * inv_m   # (C,1)
    scale = g_ref[...] * lax.rsqrt(var + eps)
    shift = b_ref[...] - mean * scale
    y_ref[...] = (x * scale + shift).astype(y_ref.dtype)
    mean_ref[...] = mean
    var_ref[...] = var


# ---------------------------------------------------------------------------
# Pallas-call wrappers.
# ---------------------------------------------------------------------------
def _channel_stats_3d(x3, cfg):
    """Streaming pass 1: per-channel sum and sum-of-squares (f32)."""
    N, C, HW = x3.shape
    itemsize = x3.dtype.itemsize
    nb, ts = _choose_block(N, C, HW, itemsize, cfg["p1_block"])
    NB, NS = N // nb, HW // ts
    block_bytes = nb * C * ts * itemsize
    acc_bytes = 2 * C * ts * 4
    x_spec = pl.BlockSpec((nb, C, ts), lambda b, s: (b, 0, s))
    part_spec = pl.BlockSpec((None, C, 1), lambda b, s: (b, 0, 0))
    psum, psq = pl.pallas_call(
        _stats_kernel,
        out_shape=(jax.ShapeDtypeStruct((NB, C, 1), jnp.float32),
                   jax.ShapeDtypeStruct((NB, C, 1), jnp.float32)),
        grid=(NB, NS),
        in_specs=[x_spec],
        out_specs=(part_spec, part_spec),
        scratch_shapes=[pltpu.VMEM((C, ts), jnp.float32),
                        pltpu.VMEM((C, ts), jnp.float32)],
        compiler_params=pltpu.CompilerParams(
            # Batch-block axis is parallel so both v7x TensorCores stream x;
            # the spatial axis carries the VMEM-resident reduction.
            dimension_semantics=("parallel", "arbitrary"),
            vmem_limit_bytes=_vmem_limit(
                cfg, 2 * block_bytes + acc_bytes + (2 << 20))),
    )(x3)
    # Tiny NB-way reduction of the per-batch-block partials (XLA side).
    total_sum = jnp.sum(psum[:, :, 0], axis=0)
    total_sq = jnp.sum(psq[:, :, 0], axis=0)
    return total_sum, total_sq


def _affine_3d(x3, scale, shift, cfg):
    """Streaming pass 2: y = x * scale + shift over (N, C, HW)."""
    N, C, HW = x3.shape
    itemsize = x3.dtype.itemsize
    nb, ts = _choose_block(N, C, HW, itemsize, cfg["p2_block"])
    block_bytes = nb * C * ts * itemsize
    x_spec = pl.BlockSpec((nb, C, ts), lambda b, s: (b, 0, s))
    vec_spec = pl.BlockSpec((C, 1), lambda b, s: (0, 0))
    return pl.pallas_call(
        _affine_kernel,
        out_shape=jax.ShapeDtypeStruct((N, C, HW), x3.dtype),
        grid=(N // nb, HW // ts),
        in_specs=[x_spec, vec_spec, vec_spec],
        out_specs=x_spec,
        compiler_params=pltpu.CompilerParams(
            dimension_semantics=("parallel", "parallel"),
            vmem_limit_bytes=_vmem_limit(cfg, 4 * block_bytes + (2 << 20))),
    )(x3, scale, shift)


def batch_norm_pallas(x, gamma, beta, moving_mean, moving_var,
                      eps=1e-5, momentum=0.9, training=True, cfg=None):
    """Forward of the d2l-style `batch_norm` for 2-D (N, C) or 4-D NCHW input."""
    assert x.ndim in (2, 4)
    cfg = _budgets() if cfg is None else cfg

    if x.ndim == 2:
        N, C = x.shape
        x4 = x.reshape(N, C, 1, 1)   # 2-D path == 4-D path with H = W = 1
    else:
        x4 = x
        N, C = x4.shape[0], x4.shape[1]
    _, _, H, W = x4.shape
    HW = H * W
    x3 = x4.reshape(N, C, HW)        # NCHW-native: H*W on the lane axis (free)
    g = gamma.reshape(C).astype(jnp.float32)
    b = beta.reshape(C).astype(jnp.float32)

    if training:
        if N * C * HW * 4 <= cfg["fused_x"]:
            # Single-pass fast path: x read once, exact two-pass variance.
            y3, mean_c1, var_c1 = pl.pallas_call(
                functools.partial(_fused_train_kernel, eps=eps),
                out_shape=(jax.ShapeDtypeStruct((N, C, HW), x3.dtype),
                           jax.ShapeDtypeStruct((C, 1), jnp.float32),
                           jax.ShapeDtypeStruct((C, 1), jnp.float32)),
                compiler_params=pltpu.CompilerParams(
                    vmem_limit_bytes=cfg["fused_vmem"]),
            )(x3, g.reshape(C, 1), b.reshape(C, 1))
            mean, var = mean_c1[:, 0], var_c1[:, 0]
        else:
            # Streaming two-pass path (HBM-bound): stats then normalize.
            total_sum, total_sq = _channel_stats_3d(x3, cfg)
            m = float(N * HW)
            mean = total_sum / m
            # E[x^2] - E[x]^2 over (C, ts) f32 lane-partials; clamp guards
            # tiny negative rounding.  TODO(synk): shifted / two-pass variance
            # for extreme |mean|/std ratios at very large N*H*W.
            var = jnp.maximum(total_sq / m - mean * mean, 0.0)
            inv_std = lax.rsqrt(var + eps)
            scale = (g * inv_std).reshape(C, 1)
            shift = (b - mean * g * inv_std).reshape(C, 1)
            y3 = _affine_3d(x3, scale, shift, cfg)
        new_mm = (momentum * moving_mean + (1.0 - momentum)
                  * mean.reshape(moving_mean.shape).astype(moving_mean.dtype))
        new_mv = (momentum * moving_var + (1.0 - momentum)
                  * var.reshape(moving_var.shape).astype(moving_var.dtype))
    else:
        # Eval mode: normalize with the moving statistics (single affine pass).
        mm = moving_mean.reshape(C).astype(jnp.float32)
        mv = moving_var.reshape(C).astype(jnp.float32)
        inv_std = lax.rsqrt(mv + eps)
        scale = (g * inv_std).reshape(C, 1)
        shift = (b - mm * g * inv_std).reshape(C, 1)
        y3 = _affine_3d(x3, scale, shift, cfg)
        new_mm, new_mv = moving_mean, moving_var

    return y3.reshape(x.shape), new_mm, new_mv


class BatchNormPallas:
    """Mirror of the PyTorch `BatchNorm` module (d2l spec)."""

    def __init__(self, num_features, num_dims):
        shape = (1, num_features) if num_dims == 2 else (1, num_features, 1, 1)
        self.gamma = jnp.ones(shape, jnp.float32)
        self.beta = jnp.zeros(shape, jnp.float32)
        self.moving_mean = jnp.zeros(shape, jnp.float32)
        self.moving_var = jnp.ones(shape, jnp.float32)
        self.training = True   # analogue of torch.is_grad_enabled()

    def __call__(self, x):
        y, self.moving_mean, self.moving_var = batch_norm_pallas(
            x, self.gamma, self.beta, self.moving_mean, self.moving_var,
            eps=1e-5, momentum=0.9, training=self.training)
        return y


def _reference_4d(x, gamma, beta, moving_mean, moving_var, eps, momentum):
    mean = jnp.mean(x, axis=(0, 2, 3), keepdims=True)
    var = jnp.mean((x - mean) ** 2, axis=(0, 2, 3), keepdims=True)
    y = gamma * (x - mean) / jnp.sqrt(var + eps) + beta
    return (y,
            momentum * moving_mean + (1.0 - momentum) * mean,
            momentum * moving_var + (1.0 - momentum) * var)


if __name__ == "__main__":
    key = jax.random.PRNGKey(0)

    # 1) Module forward on a small NCHW input (exercises the fused fast path).
    N, C, H, W = 2, 4, 16, 16
    key, sub = jax.random.split(key)
    x = jax.random.normal(sub, (N, C, H, W), dtype=jnp.float32)
    bn = BatchNormPallas(num_features=C, num_dims=4)
    y = jax.block_until_ready(bn(x))
    y_ref, mm_ref, mv_ref = _reference_4d(
        x, jnp.ones((1, C, 1, 1)), jnp.zeros((1, C, 1, 1)),
        jnp.zeros((1, C, 1, 1)), jnp.ones((1, C, 1, 1)), 1e-5, 0.9)
    assert jnp.allclose(y, y_ref, atol=1e-5, rtol=1e-5)
    assert jnp.allclose(bn.moving_mean, mm_ref, atol=1e-5, rtol=1e-5)
    assert jnp.allclose(bn.moving_var, mv_ref, atol=1e-5, rtol=1e-5)

    # 2) Streaming two-pass path, forced via tiny block budgets, on both a
    #    128-divisible and a ragged spatial size (small shapes, real grids).
    force = dict(p1_block=16 << 10, p2_block=16 << 10, vmem=32 << 20,
                 vmem_cap=32 << 20, fused_x=0, fused_vmem=32 << 20)
    for shape in ((2, 8, 32, 32),    # HW=1024: spatial tiling + batch fold
                  (4, 8, 14, 14)):   # HW=196 (ragged): full-HW lane blocks
        n, c, h, w = shape
        key, sub = jax.random.split(key)
        xs = jax.random.normal(sub, shape, dtype=jnp.float32) * 0.7 + 0.3
        gamma = jnp.full((1, c, 1, 1), 1.5, jnp.float32)
        beta = jnp.full((1, c, 1, 1), -0.25, jnp.float32)
        mm0 = jnp.zeros((1, c, 1, 1), jnp.float32)
        mv0 = jnp.ones((1, c, 1, 1), jnp.float32)
        ys, mms, mvs = batch_norm_pallas(xs, gamma, beta, mm0, mv0,
                                         eps=1e-5, momentum=0.9,
                                         training=True, cfg=force)
        ys = jax.block_until_ready(ys)
        yr, mmr, mvr = _reference_4d(xs, gamma, beta, mm0, mv0, 1e-5, 0.9)
        assert jnp.allclose(ys, yr, atol=1e-4, rtol=1e-4)
        assert jnp.allclose(mms, mmr, atol=1e-4, rtol=1e-4)
        assert jnp.allclose(mvs, mvr, atol=1e-4, rtol=1e-4)

    # 3) 2-D (N, C) input path.
    key, sub = jax.random.split(key)
    x2 = jax.random.normal(sub, (8, 32), dtype=jnp.float32)
    bn2 = BatchNormPallas(num_features=32, num_dims=2)
    y2 = jax.block_until_ready(bn2(x2))
    mean2 = jnp.mean(x2, axis=0)
    var2 = jnp.mean((x2 - mean2) ** 2, axis=0)
    y2_ref = (x2 - mean2) / jnp.sqrt(var2 + 1e-5)
    assert jnp.allclose(y2, y2_ref, atol=1e-5, rtol=1e-5)

    print("KERNEL_OK")
</pallas_src>

<mosaic_0001>
module attributes {stable_mosaic.version = 11 : i64} {
  func.func @_fused_train_kernel(%arg0: memref<2x4x256xf32, #tpu.memory_space<vmem>>, %arg1: memref<4x1xf32, #tpu.memory_space<vmem>>, %arg2: memref<4x1xf32, #tpu.memory_space<vmem>>, %arg3: memref<2x4x256xf32, #tpu.memory_space<vmem>>, %arg4: memref<4x1xf32, #tpu.memory_space<vmem>>, %arg5: memref<4x1xf32, #tpu.memory_space<vmem>>) attributes {dimension_semantics = [], scalar_prefetch = 0 : i64, scratch_operands = 0 : i64, tpu.core_type = #tpu.core_type<tc>} {
    %c0 = arith.constant 0 : index
    %c0_0 = arith.constant 0 : index
    %c0_1 = arith.constant 0 : index
    %0 = vector.load %arg0[%c0, %c0_0, %c0_1] : memref<2x4x256xf32, #tpu.memory_space<vmem>>, vector<2x4x256xf32>
    %cst = arith.constant dense<0.000000e+00> : vector<4x256xf32>
    %1 = vector.multi_reduction <add>, %0, %cst [0] : vector<2x4x256xf32> to vector<4x256xf32>
    %cst_2 = arith.constant dense<0.000000e+00> : vector<4xf32>
    %2 = vector.multi_reduction <add>, %1, %cst_2 [1] : vector<4x256xf32> to vector<4xf32>
    %3 = vector.shape_cast %2 : vector<4xf32> to vector<4x1xf32>
    %cst_3 = arith.constant 0.001953125 : f32
    %4 = vector.broadcast %cst_3 : f32 to vector<4x1xf32>
    %5 = arith.mulf %3, %4 : vector<4x1xf32>
    %6 = vector.shape_cast %5 : vector<4x1xf32> to vector<1x4x1xf32>
    %7 = vector.broadcast %6 : vector<1x4x1xf32> to vector<2x4x256xf32>
    %8 = arith.subf %0, %7 : vector<2x4x256xf32>
    %9 = arith.mulf %8, %8 : vector<2x4x256xf32>
    %cst_4 = arith.constant dense<0.000000e+00> : vector<4x256xf32>
    %10 = vector.multi_reduction <add>, %9, %cst_4 [0] : vector<2x4x256xf32> to vector<4x256xf32>
    %cst_5 = arith.constant dense<0.000000e+00> : vector<4xf32>
    %11 = vector.multi_reduction <add>, %10, %cst_5 [1] : vector<4x256xf32> to vector<4xf32>
    %12 = vector.shape_cast %11 : vector<4xf32> to vector<4x1xf32>
    %cst_6 = arith.constant 0.001953125 : f32
    %13 = vector.broadcast %cst_6 : f32 to vector<4x1xf32>
    %14 = arith.mulf %12, %13 : vector<4x1xf32>
    %c0_7 = arith.constant 0 : index
    %c0_8 = arith.constant 0 : index
    %15 = vector.load %arg1[%c0_7, %c0_8] : memref<4x1xf32, #tpu.memory_space<vmem>>, vector<4x1xf32>
    %cst_9 = arith.constant 9.99999974E-6 : f32
    %16 = vector.broadcast %cst_9 : f32 to vector<4x1xf32>
    %17 = arith.addf %14, %16 : vector<4x1xf32>
    %18 = math.rsqrt %17 : vector<4x1xf32>
    %19 = arith.mulf %15, %18 : vector<4x1xf32>
    %c0_10 = arith.constant 0 : index
    %c0_11 = arith.constant 0 : index
    %20 = vector.load %arg2[%c0_10, %c0_11] : memref<4x1xf32, #tpu.memory_space<vmem>>, vector<4x1xf32>
    %21 = arith.mulf %5, %19 : vector<4x1xf32>
    %22 = arith.subf %20, %21 : vector<4x1xf32>
    %23 = vector.shape_cast %19 : vector<4x1xf32> to vector<1x4x1xf32>
    %24 = vector.broadcast %23 : vector<1x4x1xf32> to vector<2x4x256xf32>
    %25 = arith.mulf %0, %24 : vector<2x4x256xf32>
    %26 = vector.shape_cast %22 : vector<4x1xf32> to vector<1x4x1xf32>
    %27 = vector.broadcast %26 : vector<1x4x1xf32> to vector<2x4x256xf32>
    %28 = arith.addf %25, %27 : vector<2x4x256xf32>
    %c0_12 = arith.constant 0 : index
    %c0_13 = arith.constant 0 : index
    %c0_14 = arith.constant 0 : index
    %29 = vector.load %arg3[%c0_12, %c0_13, %c0_14] : memref<2x4x256xf32, #tpu.memory_space<vmem>>, vector<2x4x256xf32>
    tpu.vector_store %arg3[%c0_12, %c0_13, %c0_14], %28 {strides = array<i32>} : memref<2x4x256xf32, #tpu.memory_space<vmem>>, vector<2x4x256xf32>,
    %c0_15 = arith.constant 0 : index
    %c0_16 = arith.constant 0 : index
    %30 = vector.load %arg4[%c0_15, %c0_16] : memref<4x1xf32, #tpu.memory_space<vmem>>, vector<4x1xf32>
    tpu.vector_store %arg4[%c0_15, %c0_16], %5 {strides = array<i32>} : memref<4x1xf32, #tpu.memory_space<vmem>>, vector<4x1xf32>,
    %c0_17 = arith.constant 0 : index
    %c0_18 = arith.constant 0 : index
    %31 = vector.load %arg5[%c0_17, %c0_18] : memref<4x1xf32, #tpu.memory_space<vmem>>, vector<4x1xf32>
    tpu.vector_store %arg5[%c0_17, %c0_18], %14 {strides = array<i32>} : memref<4x1xf32, #tpu.memory_space<vmem>>, vector<4x1xf32>,
    return
  }
}

</mosaic_0001>

<llo_original>
// kernel: tpu_custom_call.1
$region0: #{tpu_custom_call.1}
  #allocation0 [shape = 'u32[]', space=smem, size = 0x4, offset = 0x4, fixed_abs, tag = 'smem constant byte address 0x4 - core index']
  #allocation1 [shape = 'u32[144,128]{1,0:T(1,128)}', space=vmem, size = 0x12000, scoped, tag = 'internal scratch']
  %s0 = inlined_call_operand.hbm [shape: f32[2,4,256], index: 0, kind: input, shape index: {}]
  %s1 = inlined_call_operand.vmem [shape: f32[4,1], index: 1, kind: input, shape index: {}]
  %s2 = inlined_call_operand.vmem [shape: f32[4,1], index: 2, kind: input, shape index: {}]
  %s3 = inlined_call_operand.hbm [shape: f32[2,4,256], index: 3, kind: output, shape index: {0}]
  %s4 = inlined_call_operand.vmem [shape: f32[4,1], index: 4, kind: output, shape index: {1}]
  %s5 = inlined_call_operand.vmem [shape: f32[4,1], index: 5, kind: output, shape index: {2}]
  %6 = xla_tuple %s3, %s4, %s5
  %s7 = sld [smem:[#allocation0]]
  $region42: #{tpu_custom_call.1} parent=0
    _
  %s9 = ssub.s32 1, %s7
  %s10 = scalar_select 0, %s9, %s7
  $region1: #{tpu_custom_call.1} parent=0
    #allocation2 [shape = 'u8[8192]{0}', space=vmem, size = 0x2000, scoped, tag = 'input window, operand 0, single buffered']
    #allocation3 [shape = 's32[1]{0}', space=sflag, size = 0x4, scoped, tag = 'scoped memory for tpu_custom_call.1']
    #allocation4 [shape = 's32[1]{0}', space=sflag, size = 0x4, scoped, tag = 'scoped memory for tpu_custom_call.1']
    #allocation5 [shape = 'u8[8192]{0}', space=vmem, size = 0x2000, scoped, tag = 'output window, operand 0, single buffered']
    %11 = vsyncpa [#allocation3], 0
    %12 = vsyncpa [#allocation4], 0
    // Predicated region
    $region2: #{tpu_custom_call.1} parent=1 // pred_check
      _
    $region3: #{tpu_custom_call.1} parent=1 // pred_check_branch
      %14 = sbr.rel (0) target = $region5
    $region4: #{tpu_custom_call.1} parent=1 // pred_region
      %s16 = ssub.s32 256, 256
      %17 = vsyncadd [#allocation3], %s16
      %s18 = sshll.u32 [#allocation2], 4
      %s19 = int_to_ptr.vmem [resolvable:$true] %s18
      %24 = dma.hbm_to_vmem [thread:$0]  %s0, 256, %s19, [#allocation3], 128, 128, 8
    $region5: #{tpu_custom_call.1} parent=1 // pred_fallthru
      _
    // Predicated region
    $region6: #{tpu_custom_call.1} parent=1 // pred_check
      _
    $region7: #{tpu_custom_call.1} parent=1 // pred_check_branch
      %26 = sbr.rel (0) target = $region9
    $region8: #{tpu_custom_call.1} parent=1 // pred_region
      _
    $region9: #{tpu_custom_call.1} parent=1 // pred_fallthru
      _
    // Predicated region
    $region10: #{tpu_custom_call.1} parent=1 // pred_check
      _
    $region11: #{tpu_custom_call.1} parent=1 // pred_check_branch
      %28 = sbr.rel (0) target = $region13
    $region12: #{tpu_custom_call.1} parent=1 // pred_region
      _
    $region13: #{tpu_custom_call.1} parent=1 // pred_fallthru
      _
    // Predicated region
    $region14: #{tpu_custom_call.1} parent=1 // pred_check
      _
    $region15: #{tpu_custom_call.1} parent=1 // pred_check_branch
      %30 = sbr.rel (0) target = $region17
    $region16: #{tpu_custom_call.1} parent=1 // pred_region
      %31 = dma.done [#allocation3], 256
    $region17: #{tpu_custom_call.1} parent=1 // pred_fallthru
      _
    %v32 = vld [vmem:[#allocation2] sm:$0xff]
    %v33 = vld [vmem:[#allocation2 + $0x8] sm:$0xff]
    %v36 = vcombine.high %v32, %v32
    %v37 = vcombine.high %v33, %v33
    %vm40 = vcmask 1043456
    %v41 = vsel %vm40, %v32, 0.0
    %v42 = vsel %vm40, %v33, 0.0
    %v43 = vadd.f32 %v41, %v42
    %v44 = vsel %vm40, %v36, 0.0
    %v45 = vsel %vm40, %v37, 0.0
    %v46 = vadd.f32 %v44, %v45
    %v47 = vsel %vm40, %v43, 0.0
    %v48 = vsel %vm40, %v46, 0.0
    %v49 = vadd.f32 %v47, %v48
    %50 = vadd.xlane.f32.xlu0 %v49
    %v51 = vpop.xlane.xlu0 %50
    %v52 = vmul.f32 %v51, 0.001953125
    %v55 = vunpack.c.l.s4 839922192
    %v56 = vunpack.c.0.s8 %v55
    %v57 = vlaneseq
    %v58 = vshrl.u32 %v57, 7
    %v59 = vsub.s32 %v56, %v58
    %v60 = vrot.slane %v52, %v59
    %v62 = vsub.f32 %v32, %v60
    %v63 = vsub.f32 %v33, %v60
    %v64 = vmul.f32 %v62, %v62
    %v65 = vmul.f32 %v63, %v63
    %v68 = vcombine.high %v64, %v64
    %v69 = vcombine.high %v65, %v65
    %v72 = vsel %vm40, %v64, 0.0
    %v73 = vsel %vm40, %v65, 0.0
    %v74 = vadd.f32 %v72, %v73
    %v75 = vsel %vm40, %v68, 0.0
    %v76 = vsel %vm40, %v69, 0.0
    %v77 = vadd.f32 %v75, %v76
    %v78 = vsel %vm40, %v74, 0.0
    %v79 = vsel %vm40, %v77, 0.0
    %v80 = vadd.f32 %v78, %v79
    %81 = vadd.xlane.f32.xlu0 %v80
    %v82 = vpop.xlane.xlu0 %81
    %v83 = vmul.f32 %v82, 0.001953125
    %v84 = vld [vmem:[%s1] sm:$0xf]
    %v85 = vadd.f32 %v83, 1e-05
    %v86 = vrsqrt.pop %v85
    %v87 = vmul.f32 %v84, %v86
    %v88 = vld [vmem:[%s2] sm:$0xf]
    %v89 = vmul.f32 %v52, %v87
    %v90 = vsub.f32 %v88, %v89
    %92 = vset.pattern.permute.xlu0 0
    %93 = vperm.xlu0 %92, %v87
    %v94 = vpop.permute.xlu0 %93
    %v96 = vunpack.c.l.s4 839922192
    %v97 = vunpack.c.0.s8 %v96
    %v98 = vlaneseq
    %v99 = vshrl.u32 %v98, 7
    %v100 = vsub.s32 %v97, %v99
    %v101 = vrot.slane %v94, %v100
    %v103 = vmul.f32 %v32, %v101
    %v104 = vmul.f32 %v33, %v101
    %106 = vset.pattern.permute.xlu0 0
    %107 = vperm.xlu0 %106, %v90
    %v108 = vpop.permute.xlu0 %107
    %v110 = vunpack.c.l.s4 839922192
    %v111 = vunpack.c.0.s8 %v110
    %v112 = vlaneseq
    %v113 = vshrl.u32 %v112, 7
    %v114 = vsub.s32 %v111, %v113
    %v115 = vrot.slane %v108, %v114
    %v117 = vadd.f32 %v103, %v115
    %v118 = vadd.f32 %v104, %v115
    %119 = vst [vmem:[#allocation5] sm:$0xff] %v117
    %120 = vst [vmem:[#allocation5 + $0x8] sm:$0xff] %v118
    %vm121 = vcmask 3072
    %122 = vst.msk [vmem:[%s4] sm:$0xf] %vm121, %v52
    %123 = vst.msk [vmem:[%s5] sm:$0xf] %vm121, %v83
    // Predicated region
    $region18: #{tpu_custom_call.1} parent=1 // pred_check
      _
    $region19: #{tpu_custom_call.1} parent=1 // pred_check_branch
      %125 = sbr.rel (0) target = $region21
    $region20: #{tpu_custom_call.1} parent=1 // pred_region
      %s127 = ssub.s32 256, 256
      %128 = vsyncadd [#allocation4], %s127
      %s129 = sshll.u32 [#allocation5], 4
      %s130 = int_to_ptr.vmem [resolvable:$true] %s129
      %135 = dma.vmem_to_hbm [thread:$0]  %s130, 256, %s3, [#allocation4], 128, 128, 8
    $region21: #{tpu_custom_call.1} parent=1 // pred_fallthru
      _
    // Predicated region
    $region22: #{tpu_custom_call.1} parent=1 // pred_check
      _
    $region23: #{tpu_custom_call.1} parent=1 // pred_check_branch
      %137 = sbr.rel (0) target = $region25
    $region24: #{tpu_custom_call.1} parent=1 // pred_region
      _
    $region25: #{tpu_custom_call.1} parent=1 // pred_fallthru
      _
    // Predicated region
    $region26: #{tpu_custom_call.1} parent=1 // pred_check
      _
    $region27: #{tpu_custom_call.1} parent=1 // pred_check_branch
      %139 = sbr.rel (0) target = $region29
    $region28: #{tpu_custom_call.1} parent=1 // pred_region
      _
    $region29: #{tpu_custom_call.1} parent=1 // pred_fallthru
      _
    // Predicated region
    $region30: #{tpu_custom_call.1} parent=1 // pred_check
      _
    $region31: #{tpu_custom_call.1} parent=1 // pred_check_branch
      %141 = sbr.rel (0) target = $region33
    $region32: #{tpu_custom_call.1} parent=1 // pred_region
      %142 = dma.done [#allocation4], 256
    $region33: #{tpu_custom_call.1} parent=1 // pred_fallthru
      _
    // Predicated region
    $region34: #{tpu_custom_call.1} parent=1 // pred_check
      _
    $region35: #{tpu_custom_call.1} parent=1 // pred_check_branch
      %144 = sbr.rel (0) target = $region37
    $region36: #{tpu_custom_call.1} parent=1 // pred_region
      _
    $region37: #{tpu_custom_call.1} parent=1 // pred_fallthru
      _
    // Predicated region
    $region38: #{tpu_custom_call.1} parent=1 // pred_check
      _
    $region39: #{tpu_custom_call.1} parent=1 // pred_check_branch
      %146 = sbr.rel (0) target = $region41
    $region40: #{tpu_custom_call.1} parent=1 // pred_region
      _
    $region41: #{tpu_custom_call.1} parent=1 // pred_fallthru
      _
    %147 = vsyncpa [#allocation3], 1
    %148 = vsyncpa [#allocation4], 1

</llo_original>
